<compile_context>
chip_gen: v7x
topology: tpu7x:2x2x1
jax: 0.10.0
libtpu: 0.0.40
codegen_flags: <defaults>
</compile_context>

<pallas_src>
import jax
import jax.numpy as jnp
from jax import lax
from jax.experimental import pallas as pl
from jax.experimental.pallas import tpu as pltpu

LN_EPS = 1e-5
VMEM_LIMIT_BYTES = 48 * 1024 * 1024          # safe on v5e/v6e (128 MiB) and v7x (64 MiB)
RESIDENT_WEIGHT_BYTES = 16 * 1024 * 1024     # keep full weight in VMEM up to this size


def _round_up(x, m):
    return ((x + m - 1) // m) * m


def _choose_tile(total, preferred, align):
    """Largest tile <= preferred that is a multiple of `align` and divides `total`."""
    if total <= preferred:
        return total
    t = (preferred // align) * align
    while t > align and total % t != 0:
        t -= align
    assert t >= align and total % t == 0, (total, preferred, align)
    return t


def _layernorm_f32(x, w, b):
    mean = jnp.mean(x, axis=-1, keepdims=True)
    xc = x - mean
    var = jnp.mean(xc * xc, axis=-1, keepdims=True)
    inv = lax.rsqrt(var + LN_EPS)
    return xc * inv * w + b


def _make_fused_kernel(has_residual):
    """1-D grid: Add + LN + matmul + bias in a single grid step (weight resident)."""
    def kernel(*refs):
        if has_residual:
            (h_ref, r_ref, w_ref, b_ref, wm_ref, bm_ref, out_ref, resout_ref) = refs
        else:
            (h_ref, w_ref, b_ref, wm_ref, bm_ref, out_ref, resout_ref) = refs
            r_ref = None

        h = h_ref[...].astype(jnp.float32)
        if has_residual:
            new_res = r_ref[...].astype(jnp.float32) + h      # drop_path == Identity
        else:
            new_res = h                                       # first block
        resout_ref[...] = new_res                             # residual_in_fp32=True

        normed = _layernorm_f32(new_res,
                                w_ref[...].astype(jnp.float32),
                                b_ref[...].astype(jnp.float32))
        # bf16 x bf16 on the MXU, f32 accumulate.
        mixed = jnp.dot(normed.astype(jnp.bfloat16), wm_ref[...],
                        preferred_element_type=jnp.float32)
        out_ref[...] = (mixed + bm_ref[...].astype(jnp.float32)).astype(out_ref.dtype)

    return kernel


def _make_ntiled_kernel(has_residual):
    """2-D grid: LN cached per token tile in bf16 scratch, matmul tiled over N."""
    def kernel(*refs):
        if has_residual:
            (h_ref, r_ref, w_ref, b_ref, wm_ref, bm_ref,
             out_ref, resout_ref, normed_ref) = refs
        else:
            (h_ref, w_ref, b_ref, wm_ref, bm_ref,
             out_ref, resout_ref, normed_ref) = refs
            r_ref = None

        @pl.when(pl.program_id(1) == 0)
        def _():
            h = h_ref[...].astype(jnp.float32)
            if has_residual:
                new_res = r_ref[...].astype(jnp.float32) + h
            else:
                new_res = h
            resout_ref[...] = new_res
            normed = _layernorm_f32(new_res,
                                    w_ref[...].astype(jnp.float32),
                                    b_ref[...].astype(jnp.float32))
            normed_ref[...] = normed.astype(normed_ref.dtype)

        mixed = jnp.dot(normed_ref[...], wm_ref[...],
                        preferred_element_type=jnp.float32)
        out_ref[...] = (mixed + bm_ref[...].astype(jnp.float32)).astype(out_ref.dtype)

    return kernel


def block_forward(hidden_states, residual, norm_w, norm_b, mixer_w, mixer_b,
                  *, tm=256, tn=512):
    """hidden_states: (B, L, D); residual: (B, L, D) or None."""
    B, L, D = hidden_states.shape
    n_tokens = B * L
    # TODO(synk): support D not a multiple of 128 via lane masking of LN stats.
    assert D % 128 == 0, "channel dim must be a multiple of 128 (TPU lane axis)"

    # Token tiling with zero-padding for non-divisible token counts.
    tm = min(tm, _round_up(n_tokens, 8))
    n_pad = _round_up(n_tokens, tm)

    h2 = hidden_states.reshape(n_tokens, D)
    has_residual = residual is not None
    r2 = residual.reshape(n_tokens, D) if has_residual else None
    if n_pad != n_tokens:
        pad = ((0, n_pad - n_tokens), (0, 0))
        h2 = jnp.pad(h2, pad)
        if has_residual:
            r2 = jnp.pad(r2, pad)

    w2 = norm_w.reshape(1, D).astype(jnp.float32)
    b2 = norm_b.reshape(1, D).astype(jnp.float32)
    wm = mixer_w.astype(jnp.bfloat16)      # MXU-native weight dtype, halves VMEM/HBM
    bm2 = mixer_b.reshape(1, D).astype(jnp.float32)

    token_spec = pl.BlockSpec((tm, D), lambda i, *_: (i, 0))
    args = [h2] + ([r2] if has_residual else []) + [w2, b2, wm, bm2]

    weight_bytes = D * D * 2
    out_shape = (
        jax.ShapeDtypeStruct((n_pad, D), hidden_states.dtype),   # mixer output
        jax.ShapeDtypeStruct((n_pad, D), jnp.float32),           # residual (fp32)
    )

    if weight_bytes <= RESIDENT_WEIGHT_BYTES:
        # ---- Fast path: full weight resident in VMEM, 1-D token grid. ----
        kernel = _make_fused_kernel(has_residual)
        in_specs = [token_spec] + ([token_spec] if has_residual else []) + [
            pl.BlockSpec((1, D), lambda i: (0, 0)),      # LN weight (resident)
            pl.BlockSpec((1, D), lambda i: (0, 0)),      # LN bias (resident)
            pl.BlockSpec((D, D), lambda i: (0, 0)),      # full mixer weight (resident)
            pl.BlockSpec((1, D), lambda i: (0, 0)),      # mixer bias (resident)
        ]
        out, res_out = pl.pallas_call(
            kernel,
            out_shape=out_shape,
            grid=(n_pad // tm,),
            in_specs=in_specs,
            out_specs=(
                pl.BlockSpec((tm, D), lambda i: (i, 0)),
                pl.BlockSpec((tm, D), lambda i: (i, 0)),
            ),
            compiler_params=pltpu.CompilerParams(
                dimension_semantics=("parallel",),
                vmem_limit_bytes=VMEM_LIMIT_BYTES,
            ),
        )(*args)
    else:
        # ---- Fallback: N-tiled mixer weight, LN cached in bf16 scratch. ----
        tn = _choose_tile(D, tn, 128)
        kernel = _make_ntiled_kernel(has_residual)
        in_specs = [token_spec] + ([token_spec] if has_residual else []) + [
            pl.BlockSpec((1, D), lambda i, j: (0, 0)),   # LN weight
            pl.BlockSpec((1, D), lambda i, j: (0, 0)),   # LN bias
            pl.BlockSpec((D, tn), lambda i, j: (0, j)),  # mixer weight, N-tiled
            pl.BlockSpec((1, tn), lambda i, j: (0, j)),  # mixer bias tile
        ]
        out, res_out = pl.pallas_call(
            kernel,
            out_shape=out_shape,
            grid=(n_pad // tm, D // tn),
            in_specs=in_specs,
            out_specs=(
                pl.BlockSpec((tm, tn), lambda i, j: (i, j)),
                pl.BlockSpec((tm, D), lambda i, j: (i, 0)),   # resident across j
            ),
            scratch_shapes=[pltpu.VMEM((tm, D), jnp.bfloat16)],  # normed activations
            compiler_params=pltpu.CompilerParams(
                dimension_semantics=("parallel", "arbitrary"),
                vmem_limit_bytes=VMEM_LIMIT_BYTES,
            ),
        )(*args)

    if n_pad != n_tokens:
        out = out[:n_tokens]
        res_out = res_out[:n_tokens]
    return out.reshape(B, L, D), res_out.reshape(B, L, D)


def block_reference(hidden_states, residual, norm_w, norm_b, mixer_w, mixer_b):
    if residual is None:
        residual = hidden_states
    else:
        residual = residual + hidden_states
    x = residual.astype(jnp.float32)
    mean = jnp.mean(x, axis=-1, keepdims=True)
    xc = x - mean
    var = jnp.mean(xc * xc, axis=-1, keepdims=True)
    normed = xc * lax.rsqrt(var + LN_EPS) * norm_w + norm_b
    mixed = normed @ mixer_w + mixer_b
    return mixed.astype(hidden_states.dtype), residual.astype(jnp.float32)


if __name__ == "__main__":
    B, L, D = 2, 16, 128   # small synthetic shapes; D multiple of 128 for lanes

    key = jax.random.PRNGKey(0)
    k1, k2, k3, k4 = jax.random.split(key, 4)

    hidden_states = jax.random.normal(k1, (B, L, D), dtype=jnp.float32)
    residual = jax.random.normal(k2, (B, L, D), dtype=jnp.float32)

    # deterministic parameter init (nn.LayerNorm defaults: weight=1, bias=0)
    norm_w = jnp.ones((D,), dtype=jnp.float32)
    norm_b = jnp.zeros((D,), dtype=jnp.float32)
    mixer_w = jax.random.normal(k3, (D, D), dtype=jnp.float32) * (1.0 / jnp.sqrt(D))
    mixer_b = jax.random.normal(k4, (D,), dtype=jnp.float32) * 0.01

    out, res = block_forward(hidden_states, residual, norm_w, norm_b,
                             mixer_w, mixer_b)
    jax.block_until_ready((out, res))

    ref_out, ref_res = block_reference(hidden_states, residual, norm_w, norm_b,
                                       mixer_w, mixer_b)
    # mixer matmul runs with bf16 operands (f32 accumulate) -> looser tolerance
    assert jnp.allclose(out, ref_out, atol=2e-2, rtol=2e-2), "mixer output mismatch"
    assert jnp.allclose(res, ref_res, atol=1e-6, rtol=1e-6), "residual mismatch"

    # residual=None path (first block) -- compiles a variant with no residual DMA
    out0, res0 = block_forward(hidden_states, None, norm_w, norm_b,
                               mixer_w, mixer_b)
    jax.block_until_ready((out0, res0))
    ref_out0, ref_res0 = block_reference(hidden_states, None, norm_w, norm_b,
                                         mixer_w, mixer_b)
    assert jnp.allclose(out0, ref_out0, atol=2e-2, rtol=2e-2)
    assert jnp.allclose(res0, ref_res0, atol=1e-6, rtol=1e-6)

    print("KERNEL_OK")
</pallas_src>

<mosaic_0001>
module attributes {stable_mosaic.version = 11 : i64} {
  func.func @kernel(%arg0: i32, %arg1: memref<32x128xf32, #tpu.memory_space<vmem>>, %arg2: memref<32x128xf32, #tpu.memory_space<vmem>>, %arg3: memref<1x128xf32, #tpu.memory_space<vmem>>, %arg4: memref<1x128xf32, #tpu.memory_space<vmem>>, %arg5: memref<128x128xbf16, #tpu.memory_space<vmem>>, %arg6: memref<1x128xf32, #tpu.memory_space<vmem>>, %arg7: memref<32x128xf32, #tpu.memory_space<vmem>>, %arg8: memref<32x128xf32, #tpu.memory_space<vmem>>) attributes {dimension_semantics = [#tpu.dimension_semantics<parallel>], iteration_bounds = array<i64: 1>, scalar_prefetch = 0 : i64, scratch_operands = 0 : i64, tpu.core_type = #tpu.core_type<tc>, window_params = [{transform_indices = @transform_0, window_bounds = array<i64: 32, 128>}, {transform_indices = @transform_1, window_bounds = array<i64: 32, 128>}, {pipeline_mode = #tpu.pipeline_mode<synchronous>, transform_indices = @transform_2, window_bounds = array<i64: 1, 128>}, {pipeline_mode = #tpu.pipeline_mode<synchronous>, transform_indices = @transform_3, window_bounds = array<i64: 1, 128>}, {pipeline_mode = #tpu.pipeline_mode<synchronous>, transform_indices = @transform_4, window_bounds = array<i64: 128, 128>}, {pipeline_mode = #tpu.pipeline_mode<synchronous>, transform_indices = @transform_5, window_bounds = array<i64: 1, 128>}, {transform_indices = @transform_6, window_bounds = array<i64: 32, 128>}, {transform_indices = @transform_7, window_bounds = array<i64: 32, 128>}]} {
    %c0 = arith.constant 0 : index
    %c0_0 = arith.constant 0 : index
    %0 = vector.load %arg1[%c0, %c0_0] : memref<32x128xf32, #tpu.memory_space<vmem>>, vector<32x128xf32>
    %c0_1 = arith.constant 0 : index
    %c0_2 = arith.constant 0 : index
    %1 = vector.load %arg2[%c0_1, %c0_2] : memref<32x128xf32, #tpu.memory_space<vmem>>, vector<32x128xf32>
    %2 = arith.addf %1, %0 : vector<32x128xf32>
    %c0_3 = arith.constant 0 : index
    %c0_4 = arith.constant 0 : index
    %3 = vector.load %arg8[%c0_3, %c0_4] : memref<32x128xf32, #tpu.memory_space<vmem>>, vector<32x128xf32>
    tpu.vector_store %arg8[%c0_3, %c0_4], %2 {strides = array<i32>} : memref<32x128xf32, #tpu.memory_space<vmem>>, vector<32x128xf32>,
    %c0_5 = arith.constant 0 : index
    %c0_6 = arith.constant 0 : index
    %4 = vector.load %arg3[%c0_5, %c0_6] : memref<1x128xf32, #tpu.memory_space<vmem>>, vector<1x128xf32>
    %c0_7 = arith.constant 0 : index
    %c0_8 = arith.constant 0 : index
    %5 = vector.load %arg4[%c0_7, %c0_8] : memref<1x128xf32, #tpu.memory_space<vmem>>, vector<1x128xf32>
    %cst = arith.constant dense<0.000000e+00> : vector<32xf32>
    %6 = vector.multi_reduction <add>, %2, %cst [1] : vector<32x128xf32> to vector<32xf32>
    %7 = vector.shape_cast %6 : vector<32xf32> to vector<32x1xf32>
    %cst_9 = arith.constant 1.280000e+02 : f32
    %8 = vector.broadcast %cst_9 : f32 to vector<32x1xf32>
    %9 = arith.divf %7, %8 : vector<32x1xf32>
    %10 = vector.broadcast %9 : vector<32x1xf32> to vector<32x128xf32>
    %11 = arith.subf %2, %10 : vector<32x128xf32>
    %12 = arith.mulf %11, %11 : vector<32x128xf32>
    %cst_10 = arith.constant dense<0.000000e+00> : vector<32xf32>
    %13 = vector.multi_reduction <add>, %12, %cst_10 [1] : vector<32x128xf32> to vector<32xf32>
    %14 = vector.shape_cast %13 : vector<32xf32> to vector<32x1xf32>
    %cst_11 = arith.constant 1.280000e+02 : f32
    %15 = vector.broadcast %cst_11 : f32 to vector<32x1xf32>
    %16 = arith.divf %14, %15 : vector<32x1xf32>
    %cst_12 = arith.constant 9.99999974E-6 : f32
    %17 = vector.broadcast %cst_12 : f32 to vector<32x1xf32>
    %18 = arith.addf %16, %17 : vector<32x1xf32>
    %19 = math.rsqrt %18 : vector<32x1xf32>
    %20 = vector.broadcast %19 : vector<32x1xf32> to vector<32x128xf32>
    %21 = arith.mulf %11, %20 : vector<32x128xf32>
    %22 = vector.broadcast %4 : vector<1x128xf32> to vector<32x128xf32>
    %23 = arith.mulf %21, %22 : vector<32x128xf32>
    %24 = vector.broadcast %5 : vector<1x128xf32> to vector<32x128xf32>
    %25 = arith.addf %23, %24 : vector<32x128xf32>
    %26 = arith.truncf %25 : vector<32x128xf32> to vector<32x128xbf16>
    %c0_13 = arith.constant 0 : index
    %c0_14 = arith.constant 0 : index
    %27 = vector.load %arg5[%c0_13, %c0_14] : memref<128x128xbf16, #tpu.memory_space<vmem>>, vector<128x128xbf16>
    %cst_15 = arith.constant dense<0.000000e+00> : vector<32x128xf32>
    %28 = tpu.matmul %26, %27, %cst_15 {dimension_numbers = #tpu.dot_dimension_numbers<[1], [0], [0], [1], [0, 0, 1, 1], [], []>} : vector<32x128xbf16>, vector<128x128xbf16>, vector<32x128xf32> -> vector<32x128xf32>
    %c0_16 = arith.constant 0 : index
    %c0_17 = arith.constant 0 : index
    %29 = vector.load %arg6[%c0_16, %c0_17] : memref<1x128xf32, #tpu.memory_space<vmem>>, vector<1x128xf32>
    %30 = vector.broadcast %29 : vector<1x128xf32> to vector<32x128xf32>
    %31 = arith.addf %28, %30 : vector<32x128xf32>
    %c0_18 = arith.constant 0 : index
    %c0_19 = arith.constant 0 : index
    %32 = vector.load %arg7[%c0_18, %c0_19] : memref<32x128xf32, #tpu.memory_space<vmem>>, vector<32x128xf32>
    tpu.vector_store %arg7[%c0_18, %c0_19], %31 {strides = array<i32>} : memref<32x128xf32, #tpu.memory_space<vmem>>, vector<32x128xf32>,
    return
  }
  func.func @transform_0(%arg0: i32) -> (i32, i32) {
    %c0_i32 = arith.constant 0 : i32
    %c0_i32_0 = arith.constant 0 : i32
    return %arg0, %c0_i32 : i32, i32
  }
  func.func @transform_1(%arg0: i32) -> (i32, i32) {
    %c0_i32 = arith.constant 0 : i32
    %c0_i32_0 = arith.constant 0 : i32
    return %arg0, %c0_i32 : i32, i32
  }
  func.func @transform_2(%arg0: i32) -> (i32, i32) {
    %c0_i32 = arith.constant 0 : i32
    %c0_i32_0 = arith.constant 0 : i32
    %c0_i32_1 = arith.constant 0 : i32
    return %c0_i32, %c0_i32_0 : i32, i32
  }
  func.func @transform_3(%arg0: i32) -> (i32, i32) {
    %c0_i32 = arith.constant 0 : i32
    %c0_i32_0 = arith.constant 0 : i32
    %c0_i32_1 = arith.constant 0 : i32
    return %c0_i32, %c0_i32_0 : i32, i32
  }
  func.func @transform_4(%arg0: i32) -> (i32, i32) {
    %c0_i32 = arith.constant 0 : i32
    %c0_i32_0 = arith.constant 0 : i32
    %c0_i32_1 = arith.constant 0 : i32
    return %c0_i32, %c0_i32_0 : i32, i32
  }
  func.func @transform_5(%arg0: i32) -> (i32, i32) {
    %c0_i32 = arith.constant 0 : i32
    %c0_i32_0 = arith.constant 0 : i32
    %c0_i32_1 = arith.constant 0 : i32
    return %c0_i32, %c0_i32_0 : i32, i32
  }
  func.func @transform_6(%arg0: i32) -> (i32, i32) {
    %c0_i32 = arith.constant 0 : i32
    %c0_i32_0 = arith.constant 0 : i32
    return %arg0, %c0_i32 : i32, i32
  }
  func.func @transform_7(%arg0: i32) -> (i32, i32) {
    %c0_i32 = arith.constant 0 : i32
    %c0_i32_0 = arith.constant 0 : i32
    return %arg0, %c0_i32 : i32, i32
  }
}

</mosaic_0001>

<llo_original>
// kernel: tpu_custom_call.1
$region0: #{tpu_custom_call.1}
  #allocation0 [shape = 'u32[]', space=smem, size = 0x4, offset = 0x4, fixed_abs, tag = 'smem constant byte address 0x4 - core index']
  #allocation1 [shape = 'u32[144,128]{1,0:T(1,128)}', space=vmem, size = 0x12000, scoped, tag = 'internal scratch']
  %s0 = inlined_call_operand.hbm [shape: f32[32,128], index: 0, kind: input, shape index: {}]
  %s1 = inlined_call_operand.hbm [shape: f32[32,128], index: 1, kind: input, shape index: {}]
  %s2 = inlined_call_operand.vmem [shape: f32[1,128], index: 2, kind: input, shape index: {}]
  %s3 = inlined_call_operand.vmem [shape: f32[1,128], index: 3, kind: input, shape index: {}]
  %s4 = inlined_call_operand.hbm [shape: bf16[128,128], index: 4, kind: input, shape index: {}]
  %s5 = inlined_call_operand.vmem [shape: f32[1,128], index: 5, kind: input, shape index: {}]
  %s6 = inlined_call_operand.hbm [shape: f32[32,128], index: 6, kind: output, shape index: {0}]
  %s7 = inlined_call_operand.hbm [shape: f32[32,128], index: 7, kind: output, shape index: {1}]
  %8 = xla_tuple %s6, %s7
  %s9 = sld [smem:[#allocation0]]
  $region54: #{tpu_custom_call.1} parent=0
    _
  %s11 = ssub.s32 1, %s9
  %s12 = scalar_select 0, %s11, %s9
  $region1: #{tpu_custom_call.1} parent=0
    #allocation2 [shape = 'u8[16384]{0}', space=vmem, size = 0x4000, scoped, tag = 'input window, operand 0, single buffered']
    #allocation3 [shape = 's32[1]{0}', space=sflag, size = 0x4, scoped, tag = 'scoped memory for tpu_custom_call.1']
    #allocation4 [shape = 's32[1]{0}', space=sflag, size = 0x4, scoped, tag = 'scoped memory for tpu_custom_call.1']
    #allocation5 [shape = 'u8[16384]{0}', space=vmem, size = 0x4000, scoped, tag = 'input window, operand 1, single buffered']
    #allocation6 [shape = 's32[1]{0}', space=sflag, size = 0x4, scoped, tag = 'scoped memory for tpu_custom_call.1']
    #allocation7 [shape = 'u8[32768]{0}', space=vmem, size = 0x8000, scoped, tag = 'input window, operand 4, single buffered']
    #allocation8 [shape = 'u8[16384]{0}', space=vmem, size = 0x4000, scoped, tag = 'output window, operand 0, single buffered']
    #allocation9 [shape = 'u8[16384]{0}', space=vmem, size = 0x4000, scoped, tag = 'output window, operand 1, single buffered']
    #allocation10 [shape = 's32[1]{0}', space=sflag, size = 0x4, scoped, tag = 'scoped memory for tpu_custom_call.1']
    %13 = vsyncpa [#allocation3], 0
    %14 = vsyncpa [#allocation6], 0
    %15 = vsyncpa [#allocation4], 0
    %16 = vsyncpa [#allocation10], 0
    // Predicated region
    $region2: #{tpu_custom_call.1} parent=1 // pred_check
      _
    $region3: #{tpu_custom_call.1} parent=1 // pred_check_branch
      %18 = sbr.rel (0) target = $region5
    $region4: #{tpu_custom_call.1} parent=1 // pred_region
      %s20 = ssub.s32 512, 512
      %21 = vsyncadd [#allocation3], %s20
      %s22 = sshll.u32 [#allocation2], 4
      %s23 = int_to_ptr.vmem [resolvable:$true] %s22
      %28 = dma.hbm_to_vmem [thread:$0]  %s0, 512, %s23, [#allocation3], 128, 128, 8
    $region5: #{tpu_custom_call.1} parent=1 // pred_fallthru
      _
    // Predicated region
    $region6: #{tpu_custom_call.1} parent=1 // pred_check
      _
    $region7: #{tpu_custom_call.1} parent=1 // pred_check_branch
      %30 = sbr.rel (0) target = $region9
    $region8: #{tpu_custom_call.1} parent=1 // pred_region
      %s32 = ssub.s32 512, 512
      %33 = vsyncadd [#allocation6], %s32
      %s34 = sshll.u32 [#allocation5], 4
      %s35 = int_to_ptr.vmem [resolvable:$true] %s34
      %40 = dma.hbm_to_vmem [thread:$0]  %s1, 512, %s35, [#allocation6], 128, 128, 8
    $region9: #{tpu_custom_call.1} parent=1 // pred_fallthru
      _
    // Predicated region
    $region10: #{tpu_custom_call.1} parent=1 // pred_check
      _
    $region11: #{tpu_custom_call.1} parent=1 // pred_check_branch
      %42 = sbr.rel (0) target = $region13
    $region12: #{tpu_custom_call.1} parent=1 // pred_region
      _
    $region13: #{tpu_custom_call.1} parent=1 // pred_fallthru
      _
    // Predicated region
    $region14: #{tpu_custom_call.1} parent=1 // pred_check
      _
    $region15: #{tpu_custom_call.1} parent=1 // pred_check_branch
      %44 = sbr.rel (0) target = $region17
    $region16: #{tpu_custom_call.1} parent=1 // pred_region
      _
    $region17: #{tpu_custom_call.1} parent=1 // pred_fallthru
      _
    // Predicated region
    $region18: #{tpu_custom_call.1} parent=1 // pred_check
      _
    $region19: #{tpu_custom_call.1} parent=1 // pred_check_branch
      %46 = sbr.rel (0) target = $region21
    $region20: #{tpu_custom_call.1} parent=1 // pred_region
      %s48 = ssub.s32 1024, 1024
      %49 = vsyncadd [#allocation6], %s48
      %s50 = sshll.u32 [#allocation7], 4
      %s51 = int_to_ptr.vmem [resolvable:$true] %s50
      %56 = dma.hbm_to_vmem [thread:$0]  %s4, 1024, %s51, [#allocation6], 64, 64, 4
    $region21: #{tpu_custom_call.1} parent=1 // pred_fallthru
      _
    // Predicated region
    $region22: #{tpu_custom_call.1} parent=1 // pred_check
      _
    $region23: #{tpu_custom_call.1} parent=1 // pred_check_branch
      %58 = sbr.rel (0) target = $region25
    $region24: #{tpu_custom_call.1} parent=1 // pred_region
      _
    $region25: #{tpu_custom_call.1} parent=1 // pred_fallthru
      _
    // Predicated region
    $region26: #{tpu_custom_call.1} parent=1 // pred_check
      _
    $region27: #{tpu_custom_call.1} parent=1 // pred_check_branch
      %60 = sbr.rel (0) target = $region29
    $region28: #{tpu_custom_call.1} parent=1 // pred_region
      %61 = dma.done [#allocation3], 512
    $region29: #{tpu_custom_call.1} parent=1 // pred_fallthru
      _
    // Predicated region
    $region30: #{tpu_custom_call.1} parent=1 // pred_check
      _
    $region31: #{tpu_custom_call.1} parent=1 // pred_check_branch
      %63 = sbr.rel (0) target = $region33
    $region32: #{tpu_custom_call.1} parent=1 // pred_region
      %64 = dma.done [#allocation6], 512
    $region33: #{tpu_custom_call.1} parent=1 // pred_fallthru
      _
    // Predicated region
    $region34: #{tpu_custom_call.1} parent=1 // pred_check
      _
    $region35: #{tpu_custom_call.1} parent=1 // pred_check_branch
      %66 = sbr.rel (0) target = $region37
    $region36: #{tpu_custom_call.1} parent=1 // pred_region
      %67 = dma.done [#allocation6], 1024
    $region37: #{tpu_custom_call.1} parent=1 // pred_fallthru
      _
    %v69 = vld [vmem:[#allocation2] sm:$0xff]
    %v70 = vld [vmem:[#allocation2 + $0x8] sm:$0xff]
    %v71 = vld [vmem:[#allocation2 + $0x10] sm:$0xff]
    %v72 = vld [vmem:[#allocation2 + $0x18] sm:$0xff]
    %v73 = vld [vmem:[#allocation5] sm:$0xff]
    %v74 = vld [vmem:[#allocation5 + $0x8] sm:$0xff]
    %v75 = vld [vmem:[#allocation5 + $0x10] sm:$0xff]
    %v76 = vld [vmem:[#allocation5 + $0x18] sm:$0xff]
    %v77 = vadd.f32 %v73, %v69
    %v78 = vadd.f32 %v74, %v70
    %v79 = vadd.f32 %v75, %v71
    %v80 = vadd.f32 %v76, %v72
    %81 = vst [vmem:[#allocation9] sm:$0xff] %v77
    %82 = vst [vmem:[#allocation9 + $0x8] sm:$0xff] %v78
    %83 = vst [vmem:[#allocation9 + $0x10] sm:$0xff] %v79
    %84 = vst [vmem:[#allocation9 + $0x18] sm:$0xff] %v80
    %v85 = vld [vmem:[%s2] sm:$0x1]
    %v86 = vld [vmem:[%s3] sm:$0x1]
    %87 = vadd.xlane.f32.xlu0 %v77
    %v88 = vpop.xlane.xlu0 %87
    %89 = vadd.xlane.f32.xlu0 %v78
    %v90 = vpop.xlane.xlu0 %89
    %91 = vadd.xlane.f32.xlu0 %v79
    %v92 = vpop.xlane.xlu0 %91
    %93 = vadd.xlane.f32.xlu0 %v80
    %v94 = vpop.xlane.xlu0 %93
    %v95 = vrcp.pop 128.0
    %v96 = vmul.f32 %v88, %v95
    %v97 = vmul.f32 %v90, %v95
    %v98 = vmul.f32 %v92, %v95
    %v99 = vmul.f32 %v94, %v95
    %v100 = vsub.f32 %v77, %v96
    %v101 = vsub.f32 %v78, %v97
    %v102 = vsub.f32 %v79, %v98
    %v103 = vsub.f32 %v80, %v99
    %v104 = vmul.f32 %v100, %v100
    %v105 = vmul.f32 %v101, %v101
    %v106 = vmul.f32 %v102, %v102
    %v107 = vmul.f32 %v103, %v103
    %108 = vadd.xlane.f32.xlu0 %v104
    %v109 = vpop.xlane.xlu0 %108
    %110 = vadd.xlane.f32.xlu0 %v105
    %v111 = vpop.xlane.xlu0 %110
    %112 = vadd.xlane.f32.xlu0 %v106
    %v113 = vpop.xlane.xlu0 %112
    %114 = vadd.xlane.f32.xlu0 %v107
    %v115 = vpop.xlane.xlu0 %114
    %v116 = vmul.f32 %v109, %v95
    %v117 = vmul.f32 %v111, %v95
    %v118 = vmul.f32 %v113, %v95
    %v119 = vmul.f32 %v115, %v95
    %v120 = vadd.f32 %v116, 1e-05
    %v121 = vadd.f32 %v117, 1e-05
    %v122 = vadd.f32 %v118, 1e-05
    %v123 = vadd.f32 %v119, 1e-05
    %v124 = vrsqrt.pop %v120
    %v125 = vrsqrt.pop %v121
    %v126 = vrsqrt.pop %v122
    %v127 = vrsqrt.pop %v123
    %v128 = vmul.f32 %v100, %v124
    %v129 = vmul.f32 %v101, %v125
    %v130 = vmul.f32 %v102, %v126
    %v131 = vmul.f32 %v103, %v127
    %v133 = vlaneseq
    %v134 = vshrl.u32 %v133, 7
    %v135 = vsub.s32 0, %v134
    %v136 = vrot.slane %v85, %v135
    %v138 = vmul.f32 %v128, %v136
    %v139 = vmul.f32 %v129, %v136
    %v140 = vmul.f32 %v130, %v136
    %v141 = vmul.f32 %v131, %v136
    %v143 = vlaneseq
    %v144 = vshrl.u32 %v143, 7
    %v145 = vsub.s32 0, %v144
    %v146 = vrot.slane %v86, %v145
    %v148 = vadd.f32 %v138, %v146
    %v149 = vadd.f32 %v139, %v146
    %v150 = vadd.f32 %v140, %v146
    %v151 = vadd.f32 %v141, %v146
    %v152 = vpack.c.bf16 %v149, %v148
    %v153 = vpack.c.bf16 %v151, %v150
    %v154 = vld [vmem:[#allocation7] sm:$0xf]
    %v155 = vld [vmem:[#allocation7 + $0x4] sm:$0xf]
    %v156 = vld [vmem:[#allocation7 + $0x8] sm:$0xf]
    %v157 = vld [vmem:[#allocation7 + $0xc] sm:$0xf]
    %v158 = vld [vmem:[#allocation7 + $0x10] sm:$0xf]
    %v159 = vld [vmem:[#allocation7 + $0x14] sm:$0xf]
    %v160 = vld [vmem:[#allocation7 + $0x18] sm:$0xf]
    %v161 = vld [vmem:[#allocation7 + $0x1c] sm:$0xf]
    %v162 = vld [vmem:[#allocation7 + $0x20] sm:$0xf]
    %v163 = vld [vmem:[#allocation7 + $0x24] sm:$0xf]
    %v164 = vld [vmem:[#allocation7 + $0x28] sm:$0xf]
    %v165 = vld [vmem:[#allocation7 + $0x2c] sm:$0xf]
    %v166 = vld [vmem:[#allocation7 + $0x30] sm:$0xf]
    %v167 = vld [vmem:[#allocation7 + $0x34] sm:$0xf]
    %v168 = vld [vmem:[#allocation7 + $0x38] sm:$0xf]
    %v169 = vld [vmem:[#allocation7 + $0x3c] sm:$0xf]
    %v170 = vld [vmem:[%s5] sm:$0x1]
    %v172 = vlaneseq
    %v173 = vshrl.u32 %v172, 7
    %v174 = vsub.s32 0, %v173
    %v175 = vrot.slane %v170, %v174
    %v193 = vunpack.c.l.b16 %v154
    %v194 = vunpack.c.l.b16 %v155
    %v195 = vunpack.c.l.b16 %v156
    %v196 = vunpack.c.l.b16 %v157
    %v197 = vunpack.c.l.b16 %v158
    %v198 = vunpack.c.l.b16 %v159
    %v199 = vunpack.c.l.b16 %v160
    %v200 = vunpack.c.l.b16 %v161
    %v201 = vunpack.c.l.b16 %v162
    %v202 = vunpack.c.l.b16 %v163
    %v203 = vunpack.c.l.b16 %v164
    %v204 = vunpack.c.l.b16 %v165
    %v205 = vunpack.c.l.b16 %v166
    %v206 = vunpack.c.l.b16 %v167
    %v207 = vunpack.c.l.b16 %v168
    %v208 = vunpack.c.l.b16 %v169
    %v209 = vpack.c.b16 %v194, %v193
    %v210 = vpack.c.b16 %v196, %v195
    %v211 = vpack.c.b16 %v198, %v197
    %v212 = vpack.c.b16 %v200, %v199
    %v213 = vpack.c.b16 %v202, %v201
    %v214 = vpack.c.b16 %v204, %v203
    %v215 = vpack.c.b16 %v206, %v205
    %v216 = vpack.c.b16 %v208, %v207
    %225 = vmatprep.subr.bf16.mxu0 0
    %226 = vmatpush1.bf16.msra.mxu0 %v209
    %227 = vmatprep.subr.bf16.mxu0 0
    %228 = vmatpush1.bf16.msra.mxu0 %v210
    %229 = vmatprep.subr.bf16.mxu0 0
    %230 = vmatpush1.bf16.msra.mxu0 %v211
    %231 = vmatprep.subr.bf16.mxu0 0
    %232 = vmatpush1.bf16.msra.mxu0 %v212
    %233 = vmatprep.subr.bf16.mxu0 0
    %234 = vmatpush1.bf16.msra.mxu0 %v213
    %235 = vmatprep.subr.bf16.mxu0 0
    %236 = vmatpush1.bf16.msra.mxu0 %v214
    %237 = vmatprep.subr.bf16.mxu0 0
    %238 = vmatpush1.bf16.msra.mxu0 %v215
    %239 = vmatprep.subr.bf16.mxu0 0
    %240 = vmatpush1.bf16.msra.mxu0 %v216
    %241 = vmatprep.subr.bf16.mxu0 0
    %242 = vmatpush1.bf16.msra.mxu0 0
    %243 = vmatprep.subr.bf16.mxu0 0
    %244 = vmatpush1.bf16.msra.mxu0 0
    %245 = vmatprep.subr.bf16.mxu0 0
    %246 = vmatpush1.bf16.msra.mxu0 0
    %247 = vmatprep.subr.bf16.mxu0 0
    %248 = vmatpush1.bf16.msra.mxu0 0
    %249 = vmatprep.subr.bf16.mxu0 0
    %250 = vmatpush1.bf16.msra.mxu0 0
    %251 = vmatprep.subr.bf16.mxu0 0
    %252 = vmatpush1.bf16.msra.mxu0 0
    %253 = vmatprep.subr.bf16.mxu0 0
    %254 = vmatpush1.bf16.msra.mxu0 0
    %255 = vmatprep.subr.bf16.mxu0 0
    %256 = vmatpush1.bf16.msra.mxu0 0
    %257 = vmatprep.mubr.bf16.mxu0 0
    %258 = vmatmul.mubr.bf16.gmra.mrb[0].mxu0 %v152
    %v259 = vpop.f32.mrb[0].mxu0
    %v260 = vadd.f32 %v175, %v259
    %v261 = vpop.f32.mrb[0].mxu0
    %v262 = vpop.f32.mrb[0].mxu0
    %v263 = vadd.f32 %v175, %v262
    %v264 = vpop.f32.mrb[0].mxu0
    %265 = vmatprep.mubr.bf16.mxu0 0
    %266 = vmatmul.mubr.bf16.gmra.mrb[0].mxu0 %v153
    %v267 = vpop.f32.mrb[0].mxu0
    %v268 = vadd.f32 %v175, %v267
    %v269 = vpop.f32.mrb[0].mxu0
    %v270 = vpop.f32.mrb[0].mxu0
    %v271 = vadd.f32 %v175, %v270
    %v272 = vpop.f32.mrb[0].mxu0
    %273 = vdwg.mxu0
    %274 = vst [vmem:[#allocation8] sm:$0xff] %v260
    %275 = vst [vmem:[#allocation8 + $0x8] sm:$0xff] %v263
    %276 = vst [vmem:[#allocation8 + $0x10] sm:$0xff] %v268
    %277 = vst [vmem:[#allocation8 + $0x18] sm:$0xff] %v271
    // Predicated region
    $region38: #{tpu_custom_call.1} parent=1 // pred_check
      _
    $region39: #{tpu_custom_call.1} parent=1 // pred_check_branch
      %279 = sbr.rel (0) target = $region41
    $region40: #{tpu_custom_call.1} parent=1 // pred_region
      %s281 = ssub.s32 512, 512
      %282 = vsyncadd [#allocation4], %s281
      %s283 = sshll.u32 [#allocation8], 4
      %s284 = int_to_ptr.vmem [resolvable:$true] %s283
      %289 = dma.vmem_to_hbm [thread:$0]  %s284, 512, %s6, [#allocation4], 128, 128, 8
    $region41: #{tpu_custom_call.1} parent=1 // pred_fallthru
      _
    // Predicated region
    $region42: #{tpu_custom_call.1} parent=1 // pred_check
      _
    $region43: #{tpu_custom_call.1} parent=1 // pred_check_branch
      %291 = sbr.rel (0) target = $region45
    $region44: #{tpu_custom_call.1} parent=1 // pred_region
      %s293 = ssub.s32 512, 512
      %294 = vsyncadd [#allocation10], %s293
      %s295 = sshll.u32 [#allocation9], 4
      %s296 = int_to_ptr.vmem [resolvable:$true] %s295
      %301 = dma.vmem_to_hbm [thread:$0]  %s296, 512, %s7, [#allocation10], 128, 128, 8
    $region45: #{tpu_custom_call.1} parent=1 // pred_fallthru
      _
    // Predicated region
    $region46: #{tpu_custom_call.1} parent=1 // pred_check
      _
    $region47: #{tpu_custom_call.1} parent=1 // pred_check_branch
      %303 = sbr.rel (0) target = $region49
    $region48: #{tpu_custom_call.1} parent=1 // pred_region
      %304 = dma.done [#allocation4], 512
    $region49: #{tpu_custom_call.1} parent=1 // pred_fallthru
      _
    // Predicated region
    $region50: #{tpu_custom_call.1} parent=1 // pred_check
      _
    $region51: #{tpu_custom_call.1} parent=1 // pred_check_branch
      %306 = sbr.rel (0) target = $region53
    $region52: #{tpu_custom_call.1} parent=1 // pred_region
      %307 = dma.done [#allocation10], 512
    $region53: #{tpu_custom_call.1} parent=1 // pred_fallthru
      _
    %308 = vsyncpa [#allocation3], 1
    %309 = vsyncpa [#allocation6], 1
    %310 = vsyncpa [#allocation4], 1
    %311 = vsyncpa [#allocation10], 1

</llo_original>
